<compile_context>
chip_gen: v6e
topology: v6e:2x2x1
jax: 0.10.0
libtpu: 0.0.40
codegen_flags: <defaults>
</compile_context>

<pallas_src>
import jax
import jax.numpy as jnp
from jax.experimental import pallas as pl
from jax.experimental.pallas import tpu as pltpu


def _identity_alias_kernel(x_hbm_ref, o_hbm_ref):
    # Output buffer is aliased to the input buffer (input_output_aliases={0:0});
    # IdentityRNN moves no data, so the body is intentionally a no-op.
    del x_hbm_ref, o_hbm_ref


def _identity_hbm_copy_kernel(x_hbm_ref, o_hbm_ref, copy_sem):
    # Single HBM->HBM DMA of the whole array: no VMEM round trip (no vld/vst
    # slot work, no double-buffered scratch), no per-block overhead, and no
    # generation-specific VMEM-limit tuning.  The DMA engine streams it at
    # HBM bandwidth on v5e / v6e / v7x alike.
    cp = pltpu.make_async_copy(x_hbm_ref, o_hbm_ref, copy_sem)
    cp.start()
    cp.wait()


def identity_rnn_forward(x, hiddens=(None, None), *, copy=False):
    """Pallas implementation of IdentityRNN.forward.

    Returns (x, hiddens).  By default the output aliases the input buffer
    (zero data movement, matching the reference module which returns the same
    object).  With copy=True a fresh buffer is produced via one HBM->HBM DMA.
    `hiddens` carries no computation and is passed through untouched.
    """
    if x.size == 0:
        # Degenerate input: nothing for a kernel to do.
        return x, hiddens

    nbytes = x.size * x.dtype.itemsize
    hbm_spec = pl.BlockSpec(memory_space=pl.ANY)  # raw ref, no auto-DMA/tiling

    if not copy:
        out = pl.pallas_call(
            _identity_alias_kernel,
            in_specs=[hbm_spec],
            out_specs=hbm_spec,
            out_shape=jax.ShapeDtypeStruct(x.shape, x.dtype),
            input_output_aliases={0: 0},
            cost_estimate=pl.CostEstimate(
                flops=0, transcendentals=0, bytes_accessed=0),
        )(x)
    else:
        out = pl.pallas_call(
            _identity_hbm_copy_kernel,
            in_specs=[hbm_spec],
            out_specs=hbm_spec,
            out_shape=jax.ShapeDtypeStruct(x.shape, x.dtype),
            scratch_shapes=[pltpu.SemaphoreType.DMA(())],
            cost_estimate=pl.CostEstimate(
                flops=0, transcendentals=0, bytes_accessed=2 * nbytes),
        )(x)

    # hiddens carry no computation in IdentityRNN -- returned untouched.
    return out, hiddens


if __name__ == "__main__":
    key = jax.random.PRNGKey(0)

    # Small shapes consistent with an RNN forward: (batch, seq, hidden).
    B, T, D = 2, 8, 32
    x = jax.random.normal(key, (B, T, D), dtype=jnp.float32)
    hiddens = (None, None)

    # Default (fast) path: output aliases the input buffer -- zero HBM traffic.
    y, h_out = identity_rnn_forward(x, hiddens)
    y = jax.block_until_ready(y)
    assert y.shape == x.shape and y.dtype == x.dtype
    assert bool(jnp.array_equal(y, x))           # exact identity
    assert h_out == hiddens                      # hiddens passed through unchanged

    # Materializing path: one HBM->HBM DMA producing a fresh output buffer.
    y2, h_out2 = identity_rnn_forward(x, hiddens, copy=True)
    y2 = jax.block_until_ready(y2)
    assert y2.shape == x.shape and y2.dtype == x.dtype
    assert bool(jnp.array_equal(y2, x))
    assert h_out2 == hiddens

    print("KERNEL_OK")
</pallas_src>

<mosaic_0001>
module attributes {stable_mosaic.version = 11 : i64} {
  func.func @_identity_alias_kernel(%arg0: memref<2x8x32xf32, #tpu.memory_space<any>>, %arg1: memref<2x8x32xf32, #tpu.memory_space<any>>) attributes {dimension_semantics = [], scalar_prefetch = 0 : i64, scratch_operands = 0 : i64, tpu.core_type = #tpu.core_type<tc>} {
    return
  }
}

</mosaic_0001>

<llo_original>
// kernel: tpu_custom_call.1
$region0: #{tpu_custom_call.1}
  #allocation0 [shape = 'u32[]', space=smem, size = 0x4, offset = 0x4, fixed_abs, tag = 'smem constant byte address 0x4 - core index']
  #allocation1 [shape = 'u32[144,128]{1,0:T(1,128)}', space=vmem, size = 0x12000, scoped, tag = 'internal scratch']
  %s0 = inlined_call_operand.hbm [shape: f32[2,8,32], index: 0, kind: input, shape index: {}, may-alias: {0,1}]
  %s1 = inlined_call_operand.hbm [shape: f32[2,8,32], index: 1, kind: output, shape index: {}, may-alias: {0,1}]
  %s2 = sld [smem:[#allocation0]]
  $region2: #{tpu_custom_call.1} parent=0
    _
  %s4 = ssub.s32 1, %s2
  %s5 = scalar_select 0, %s4, %s2

</llo_original>
